<compile_context>
chip_gen: v6e
topology: v6e:2x2x1
jax: 0.10.0
libtpu: 0.0.40
codegen_flags: <defaults>
</compile_context>

<pallas_src>
import functools

import jax
import jax.numpy as jnp
from jax.experimental import pallas as pl
from jax.experimental.pallas import tpu as pltpu


def _round_up(x, m):
    return (x + m - 1) // m * m


def _cdiv(a, b):
    return (a + b - 1) // b


# VMEM budget used for tile selection: comfortable on v7x (64 MiB physical, 32 MiB
# default scoped) and well inside v6e/v5e's 128 MiB physical once the limit is raised.
_VMEM_TILE_BUDGET = 36 * 1024 * 1024
_VMEM_LIMIT_CAP = 48 * 1024 * 1024


def _activate(logits_f32, act_func):
    if act_func == "softmax":
        m = jnp.max(logits_f32, axis=-1, keepdims=True)
        e = jnp.exp(logits_f32 - m)
        denom = jnp.sum(e, axis=-1, keepdims=True)
        # EUP approximate reciprocal + one Newton step: ~f32 accuracy, off the VALU.
        r = pl.reciprocal(denom, approx=True)
        r = r * (2.0 - denom * r)
        return e * r
    if act_func == "sigmoid":
        return jax.nn.sigmoid(logits_f32)
    return logits_f32


def _head_kernel_fused(x_ref, w_ref, b_ref, o_ref, *, act_func):
    # Fused path: full weight resident in VMEM (constant block index), single K step.
    # x_ref: (tb, K_pad), w_ref: (K_pad, N_pad), b_ref: (1, N_pad), o_ref: (tb, N_pad)
    logits = jnp.dot(x_ref[...], w_ref[...], preferred_element_type=jnp.float32)
    logits = logits + b_ref[...].astype(jnp.float32)
    o_ref[...] = _activate(logits, act_func).astype(o_ref.dtype)


def _head_kernel_ktiled(x_ref, w_ref, b_ref, o_ref, acc_ref, *, act_func):
    # Fallback path: K tiled on the trailing ("arbitrary") grid axis with a persistent
    # f32 VMEM accumulator; bias + activation + store only in the k==last epilogue.
    k = pl.program_id(1)

    @pl.when(k == 0)
    def _():
        acc_ref[...] = jnp.zeros_like(acc_ref)

    acc_ref[...] += jnp.dot(x_ref[...], w_ref[...],
                            preferred_element_type=jnp.float32)

    @pl.when(k == pl.num_programs(1) - 1)
    def _():
        logits = acc_ref[...] + b_ref[...].astype(jnp.float32)
        o_ref[...] = _activate(logits, act_func).astype(o_ref.dtype)


def transformer_basic_head(x, weight, bias, *, training=False, act_func="softmax",
                           block_b=256, block_k=512):
    """Pallas implementation of TransformerBasicHead.forward (single-Linear head).

    Args:
      x:      (B, dim_in) input features (feature dim last -> TPU lanes).
      weight: (num_classes, dim_in) -- native PyTorch nn.Linear layout.
      bias:   (num_classes,).
      training: if False (eval), the activation is applied (softmax over dim=1).
      act_func: 'softmax' | 'sigmoid' | 'none'.
    """
    assert x.ndim == 2, "this head instantiation operates on (B, dim_in) inputs"
    assert act_func in ("softmax", "sigmoid", "none")
    B, dim_in = x.shape
    num_classes, dim_in_w = weight.shape
    assert dim_in_w == dim_in

    # NOTE: dropout_rate == 0.0 in this config, so no dropout op is emitted.
    # NOTE: detach_final_fc only affects gradients, not forward values.
    eff_act = act_func if (not training) else "none"

    in_itemsize = jnp.dtype(x.dtype).itemsize
    out_itemsize = in_itemsize
    sublane = {4: 8, 2: 16, 1: 32}.get(in_itemsize, 8)

    N_pad = _round_up(num_classes, 128)          # lane-dense output width
    K_full = _round_up(dim_in, 128)

    # ---- batch tiling: minimize padding; give the 'parallel' axis >= 2 tiles
    # (both v7x TensorCores) whenever the batch is large enough.
    nb0 = _cdiv(B, block_b)
    if nb0 == 1 and B >= 2 * sublane:
        nb0 = 2
    tb0 = _round_up(_cdiv(B, nb0), sublane)

    def _vmem_fused(tb_):
        return (2 * tb_ * K_full * in_itemsize        # x, double-buffered
                + K_full * N_pad * in_itemsize        # weight, resident (const index)
                + 2 * tb_ * N_pad * out_itemsize      # out, double-buffered
                + N_pad * 4)                          # bias

    def _vmem_ktiled(tb_, tk_):
        return (2 * tb_ * tk_ * in_itemsize
                + 2 * tk_ * N_pad * in_itemsize       # weight tile, double-buffered
                + 2 * tb_ * N_pad * out_itemsize
                + tb_ * N_pad * 4                     # f32 accumulator
                + N_pad * 4)

    # ---- choose path + tiles against the VMEM budget --------------------------
    tb = tb0
    fused = (K_full * N_pad * in_itemsize) <= (_VMEM_TILE_BUDGET // 2)
    if fused:
        while _vmem_fused(tb) > _VMEM_TILE_BUDGET and tb > sublane:
            tb = max(sublane, _round_up(tb // 2, sublane))
        fused = _vmem_fused(tb) <= _VMEM_TILE_BUDGET

    if fused:
        tk = K_pad = K_full
        vmem_est = _vmem_fused(tb)
    else:
        tb = tb0
        nk = _cdiv(dim_in, block_k)
        tk = _round_up(_cdiv(dim_in, nk), 128)
        while _vmem_ktiled(tb, tk) > _VMEM_TILE_BUDGET and (tk > 128 or tb > sublane):
            if tk > 128:
                nk += 1
                tk = _round_up(_cdiv(dim_in, nk), 128)
            else:
                tb = max(sublane, _round_up(tb // 2, sublane))
        K_pad = _round_up(dim_in, tk)
        vmem_est = _vmem_ktiled(tb, tk)

    B_pad = _round_up(B, tb)
    nb = B_pad // tb

    # ---- pad only when needed; fold the transpose into the weight pad ---------
    if B_pad == B and K_pad == dim_in:
        x_p = x
    else:
        x_p = jnp.pad(x, ((0, B_pad - B), (0, K_pad - dim_in)))

    w_t = weight.T                                # (dim_in, num_classes) -> MXU-native RHS
    if K_pad == dim_in and N_pad == num_classes:
        w_p = w_t
    else:
        w_p = jnp.pad(w_t, ((0, K_pad - dim_in), (0, N_pad - num_classes)))

    # Padded class columns get a very negative bias so softmax sees exp()==0 (f32);
    # for 'sigmoid'/'none' the padded columns are sliced off anyway.
    pad_val = -1e30 if eff_act == "softmax" else 0.0
    b_p = jnp.pad(bias.astype(jnp.float32).reshape(1, num_classes),
                  ((0, 0), (0, N_pad - num_classes)), constant_values=pad_val)

    vmem_limit = int(min(max(vmem_est + (8 << 20), 32 << 20), _VMEM_LIMIT_CAP))

    # ---- honest cost estimate (padded traffic, actual weight re-reads) --------
    flops = 2 * B_pad * K_pad * N_pad
    transcendentals = B_pad * N_pad if eff_act in ("softmax", "sigmoid") else 0
    w_reads = 1 if fused else nb
    bytes_accessed = int(B_pad * K_pad * in_itemsize
                         + w_reads * K_pad * N_pad * in_itemsize
                         + N_pad * 4
                         + B_pad * N_pad * out_itemsize)
    cost = pl.CostEstimate(flops=flops, transcendentals=transcendentals,
                           bytes_accessed=bytes_accessed)

    if fused:
        kernel = functools.partial(_head_kernel_fused, act_func=eff_act)
        out_p = pl.pallas_call(
            kernel,
            out_shape=jax.ShapeDtypeStruct((B_pad, N_pad), x.dtype),
            grid_spec=pltpu.PrefetchScalarGridSpec(
                num_scalar_prefetch=0,
                grid=(nb,),
                in_specs=[
                    pl.BlockSpec((tb, K_pad), lambda i: (i, 0)),        # x batch tile
                    pl.BlockSpec((K_pad, N_pad), lambda i: (0, 0)),     # weight, resident
                    pl.BlockSpec((1, N_pad), lambda i: (0, 0)),         # bias, resident
                ],
                out_specs=pl.BlockSpec((tb, N_pad), lambda i: (i, 0)),
            ),
            compiler_params=pltpu.CompilerParams(
                dimension_semantics=("parallel",),
                vmem_limit_bytes=vmem_limit),
            cost_estimate=cost,
        )(x_p, w_p, b_p)
    else:
        kernel = functools.partial(_head_kernel_ktiled, act_func=eff_act)
        out_p = pl.pallas_call(
            kernel,
            out_shape=jax.ShapeDtypeStruct((B_pad, N_pad), x.dtype),
            grid_spec=pltpu.PrefetchScalarGridSpec(
                num_scalar_prefetch=0,
                grid=(nb, K_pad // tk),
                in_specs=[
                    pl.BlockSpec((tb, tk), lambda i, k: (i, k)),        # x tile
                    pl.BlockSpec((tk, N_pad), lambda i, k: (k, 0)),     # weight K-tile (K,N layout)
                    pl.BlockSpec((1, N_pad), lambda i, k: (0, 0)),      # bias
                ],
                out_specs=pl.BlockSpec((tb, N_pad), lambda i, k: (i, 0)),
                scratch_shapes=[pltpu.VMEM((tb, N_pad), jnp.float32)],
            ),
            compiler_params=pltpu.CompilerParams(
                dimension_semantics=("parallel", "arbitrary"),
                vmem_limit_bytes=vmem_limit),
            cost_estimate=cost,
        )(x_p, w_p, b_p)

    out = out_p[:B, :num_classes]
    # x = x.view(x.shape[0], -1) — already (B, num_classes).
    return out.reshape(B, -1)


def _reference(x, weight, bias, training=False, act_func="softmax"):
    logits = x @ weight.T + bias
    if not training:
        if act_func == "softmax":
            logits = jax.nn.softmax(logits, axis=1)
        elif act_func == "sigmoid":
            logits = jax.nn.sigmoid(logits)
    return logits


if __name__ == "__main__":
    key = jax.random.PRNGKey(0)
    k_x, k_w, k_b = jax.random.split(key, 3)

    # Small shapes consistent with the module's forward: (B, dim_in) -> (B, num_classes).
    B, dim_in, num_classes = 8, 32, 16
    x = jax.random.normal(k_x, (B, dim_in), dtype=jnp.float32)
    weight = jax.random.normal(k_w, (num_classes, dim_in), dtype=jnp.float32) * 0.1
    bias = jax.random.normal(k_b, (num_classes,), dtype=jnp.float32) * 0.1

    out = transformer_basic_head(x, weight, bias, training=False, act_func="softmax")
    out = jax.block_until_ready(out)
    ref = _reference(x, weight, bias)
    assert out.shape == (B, num_classes), out.shape
    assert jnp.allclose(out, ref, atol=1e-5, rtol=1e-5), "mismatch vs reference (case 1)"

    # Second small case exercising padding + two batch tiles on the fused path.
    B2, dim_in2, num_classes2 = 40, 300, 10
    k_x2, k_w2, k_b2 = jax.random.split(jax.random.PRNGKey(1), 3)
    x2 = jax.random.normal(k_x2, (B2, dim_in2), dtype=jnp.float32)
    w2 = jax.random.normal(k_w2, (num_classes2, dim_in2), dtype=jnp.float32) * 0.05
    b2 = jax.random.normal(k_b2, (num_classes2,), dtype=jnp.float32) * 0.05
    out2 = transformer_basic_head(x2, w2, b2, training=False, act_func="softmax")
    out2 = jax.block_until_ready(out2)
    ref2 = _reference(x2, w2, b2)
    assert out2.shape == (B2, num_classes2), out2.shape
    assert jnp.allclose(out2, ref2, atol=1e-5, rtol=1e-5), "mismatch vs reference (case 2)"

    print("KERNEL_OK")
</pallas_src>

<mosaic_0001>
module attributes {stable_mosaic.version = 11 : i64} {
  func.func @_head_kernel_fused(%arg0: i32, %arg1: memref<8x128xf32, #tpu.memory_space<vmem>>, %arg2: memref<128x128xf32, #tpu.memory_space<vmem>>, %arg3: memref<1x128xf32, #tpu.memory_space<vmem>>, %arg4: memref<8x128xf32, #tpu.memory_space<vmem>>) attributes {dimension_semantics = [#tpu.dimension_semantics<parallel>], iteration_bounds = array<i64: 1>, scalar_prefetch = 0 : i64, scratch_operands = 0 : i64, tpu.core_type = #tpu.core_type<tc>, window_params = [{transform_indices = @transform_0, window_bounds = array<i64: 8, 128>}, {pipeline_mode = #tpu.pipeline_mode<synchronous>, transform_indices = @transform_1, window_bounds = array<i64: 128, 128>}, {pipeline_mode = #tpu.pipeline_mode<synchronous>, transform_indices = @transform_2, window_bounds = array<i64: 1, 128>}, {transform_indices = @transform_3, window_bounds = array<i64: 8, 128>}]} {
    %c0 = arith.constant 0 : index
    %c0_0 = arith.constant 0 : index
    %0 = vector.load %arg1[%c0, %c0_0] : memref<8x128xf32, #tpu.memory_space<vmem>>, vector<8x128xf32>
    %c0_1 = arith.constant 0 : index
    %c0_2 = arith.constant 0 : index
    %1 = vector.load %arg2[%c0_1, %c0_2] : memref<128x128xf32, #tpu.memory_space<vmem>>, vector<128x128xf32>
    %cst = arith.constant dense<0.000000e+00> : vector<8x128xf32>
    %2 = tpu.matmul %0, %1, %cst {dimension_numbers = #tpu.dot_dimension_numbers<[1], [0], [0], [1], [0, 0, 1, 1], [], []>} : vector<8x128xf32>, vector<128x128xf32>, vector<8x128xf32> -> vector<8x128xf32>
    %c0_3 = arith.constant 0 : index
    %c0_4 = arith.constant 0 : index
    %3 = vector.load %arg3[%c0_3, %c0_4] : memref<1x128xf32, #tpu.memory_space<vmem>>, vector<1x128xf32>
    %4 = vector.broadcast %3 : vector<1x128xf32> to vector<8x128xf32>
    %5 = arith.addf %2, %4 : vector<8x128xf32>
    %cst_5 = arith.constant dense<0xFF800000> : vector<8xf32>
    %6 = vector.multi_reduction <maximumf>, %5, %cst_5 [1] : vector<8x128xf32> to vector<8xf32>
    %7 = vector.shape_cast %6 : vector<8xf32> to vector<8x1xf32>
    %8 = vector.broadcast %7 : vector<8x1xf32> to vector<8x128xf32>
    %9 = arith.subf %5, %8 : vector<8x128xf32>
    %10 = math.exp %9 : vector<8x128xf32>
    %cst_6 = arith.constant dense<0.000000e+00> : vector<8xf32>
    %11 = vector.multi_reduction <add>, %10, %cst_6 [1] : vector<8x128xf32> to vector<8xf32>
    %12 = vector.shape_cast %11 : vector<8xf32> to vector<8x1xf32>
    %13 = tpu.reciprocal %12 {approx = true} : vector<8x1xf32> -> vector<8x1xf32>
    %14 = arith.mulf %12, %13 : vector<8x1xf32>
    %cst_7 = arith.constant 2.000000e+00 : f32
    %15 = vector.broadcast %cst_7 : f32 to vector<8x1xf32>
    %16 = arith.subf %15, %14 : vector<8x1xf32>
    %17 = arith.mulf %13, %16 : vector<8x1xf32>
    %18 = vector.broadcast %17 : vector<8x1xf32> to vector<8x128xf32>
    %19 = arith.mulf %10, %18 : vector<8x128xf32>
    %c0_8 = arith.constant 0 : index
    %c0_9 = arith.constant 0 : index
    %20 = vector.load %arg4[%c0_8, %c0_9] : memref<8x128xf32, #tpu.memory_space<vmem>>, vector<8x128xf32>
    tpu.vector_store %arg4[%c0_8, %c0_9], %19 {strides = array<i32>} : memref<8x128xf32, #tpu.memory_space<vmem>>, vector<8x128xf32>,
    return
  }
  func.func @transform_0(%arg0: i32) -> (i32, i32) {
    %c0_i32 = arith.constant 0 : i32
    %c0_i32_0 = arith.constant 0 : i32
    return %arg0, %c0_i32 : i32, i32
  }
  func.func @transform_1(%arg0: i32) -> (i32, i32) {
    %c0_i32 = arith.constant 0 : i32
    %c0_i32_0 = arith.constant 0 : i32
    %c0_i32_1 = arith.constant 0 : i32
    return %c0_i32, %c0_i32_0 : i32, i32
  }
  func.func @transform_2(%arg0: i32) -> (i32, i32) {
    %c0_i32 = arith.constant 0 : i32
    %c0_i32_0 = arith.constant 0 : i32
    %c0_i32_1 = arith.constant 0 : i32
    return %c0_i32, %c0_i32_0 : i32, i32
  }
  func.func @transform_3(%arg0: i32) -> (i32, i32) {
    %c0_i32 = arith.constant 0 : i32
    %c0_i32_0 = arith.constant 0 : i32
    return %arg0, %c0_i32 : i32, i32
  }
}

</mosaic_0001>

<llo_original>
// kernel: tpu_custom_call.1
$region0: #{tpu_custom_call.1}
  #allocation0 [shape = 'u32[]', space=smem, size = 0x4, offset = 0x4, fixed_abs, tag = 'smem constant byte address 0x4 - core index']
  #allocation1 [shape = 'u32[144,128]{1,0:T(1,128)}', space=vmem, size = 0x12000, scoped, tag = 'internal scratch']
  %s0 = inlined_call_operand.hbm [shape: f32[8,128], index: 0, kind: input, shape index: {}]
  %s1 = inlined_call_operand.hbm [shape: f32[128,128], index: 1, kind: input, shape index: {}]
  %s2 = inlined_call_operand.vmem [shape: f32[1,128], index: 2, kind: input, shape index: {}]
  %s3 = inlined_call_operand.hbm [shape: f32[8,128], index: 3, kind: output, shape index: {}]
  %s4 = sld [smem:[#allocation0]]
  $region30: #{tpu_custom_call.1} parent=0
    _
  %s6 = ssub.s32 1, %s4
  %s7 = scalar_select 0, %s6, %s4
  $region1: #{tpu_custom_call.1} parent=0
    #allocation2 [shape = 'u8[4096]{0}', space=vmem, size = 0x1000, scoped, tag = 'input window, operand 0, single buffered']
    #allocation3 [shape = 's32[1]{0}', space=sflag, size = 0x4, scoped, tag = 'scoped memory for tpu_custom_call.1']
    #allocation4 [shape = 's32[1]{0}', space=sflag, size = 0x4, scoped, tag = 'scoped memory for tpu_custom_call.1']
    #allocation5 [shape = 'u8[65536]{0}', space=vmem, size = 0x10000, scoped, tag = 'input window, operand 1, single buffered']
    #allocation6 [shape = 's32[1]{0}', space=sflag, size = 0x4, scoped, tag = 'scoped memory for tpu_custom_call.1']
    #allocation7 [shape = 'u8[4096]{0}', space=vmem, size = 0x1000, scoped, tag = 'output window, operand 0, single buffered']
    %8 = vsyncpa [#allocation3], 0
    %9 = vsyncpa [#allocation6], 0
    %10 = vsyncpa [#allocation4], 0
    // Predicated region
    $region2: #{tpu_custom_call.1} parent=1 // pred_check
      _
    $region3: #{tpu_custom_call.1} parent=1 // pred_check_branch
      %12 = sbr.rel (0) target = $region5
    $region4: #{tpu_custom_call.1} parent=1 // pred_region
      %s14 = ssub.s32 128, 128
      %15 = vsyncadd [#allocation3], %s14
      %s17 = sshll.u32 [#allocation2], 4
      %s18 = int_to_ptr.vmem [resolvable:$true] %s17
      %20 = dma.hbm_to_vmem [thread:$0]  %s0, 128, %s18, [#allocation3]
    $region5: #{tpu_custom_call.1} parent=1 // pred_fallthru
      _
    // Predicated region
    $region6: #{tpu_custom_call.1} parent=1 // pred_check
      _
    $region7: #{tpu_custom_call.1} parent=1 // pred_check_branch
      %22 = sbr.rel (0) target = $region9
    $region8: #{tpu_custom_call.1} parent=1 // pred_region
      %s24 = ssub.s32 2048, 2048
      %25 = vsyncadd [#allocation6], %s24
      %s26 = sshll.u32 [#allocation5], 4
      %s27 = int_to_ptr.vmem [resolvable:$true] %s26
      %32 = dma.hbm_to_vmem [thread:$0]  %s1, 2048, %s27, [#allocation6], 128, 128, 8
    $region9: #{tpu_custom_call.1} parent=1 // pred_fallthru
      _
    // Predicated region
    $region10: #{tpu_custom_call.1} parent=1 // pred_check
      _
    $region11: #{tpu_custom_call.1} parent=1 // pred_check_branch
      %34 = sbr.rel (0) target = $region13
    $region12: #{tpu_custom_call.1} parent=1 // pred_region
      _
    $region13: #{tpu_custom_call.1} parent=1 // pred_fallthru
      _
    // Predicated region
    $region14: #{tpu_custom_call.1} parent=1 // pred_check
      _
    $region15: #{tpu_custom_call.1} parent=1 // pred_check_branch
      %36 = sbr.rel (0) target = $region17
    $region16: #{tpu_custom_call.1} parent=1 // pred_region
      %37 = dma.done [#allocation3], 128
    $region17: #{tpu_custom_call.1} parent=1 // pred_fallthru
      _
    // Predicated region
    $region18: #{tpu_custom_call.1} parent=1 // pred_check
      _
    $region19: #{tpu_custom_call.1} parent=1 // pred_check_branch
      %39 = sbr.rel (0) target = $region21
    $region20: #{tpu_custom_call.1} parent=1 // pred_region
      %40 = dma.done [#allocation6], 2048
    $region21: #{tpu_custom_call.1} parent=1 // pred_fallthru
      _
    %v41 = vld [vmem:[#allocation2] sm:$0xff]
    %v42 = vld [vmem:[#allocation5] sm:$0xff]
    %v43 = vld [vmem:[#allocation5 + $0x8] sm:$0xff]
    %v44 = vld [vmem:[#allocation5 + $0x10] sm:$0xff]
    %v45 = vld [vmem:[#allocation5 + $0x18] sm:$0xff]
    %v46 = vld [vmem:[#allocation5 + $0x20] sm:$0xff]
    %v47 = vld [vmem:[#allocation5 + $0x28] sm:$0xff]
    %v48 = vld [vmem:[#allocation5 + $0x30] sm:$0xff]
    %v49 = vld [vmem:[#allocation5 + $0x38] sm:$0xff]
    %v50 = vld [vmem:[#allocation5 + $0x40] sm:$0xff]
    %v51 = vld [vmem:[#allocation5 + $0x48] sm:$0xff]
    %v52 = vld [vmem:[#allocation5 + $0x50] sm:$0xff]
    %v53 = vld [vmem:[#allocation5 + $0x58] sm:$0xff]
    %v54 = vld [vmem:[#allocation5 + $0x60] sm:$0xff]
    %v55 = vld [vmem:[#allocation5 + $0x68] sm:$0xff]
    %v56 = vld [vmem:[#allocation5 + $0x70] sm:$0xff]
    %v57 = vld [vmem:[#allocation5 + $0x78] sm:$0xff]
    %v58 = vld [vmem:[%s2] sm:$0x1]
    %v60 = vlaneseq
    %v61 = vshrl.u32 %v60, 7
    %v62 = vsub.s32 0, %v61
    %v63 = vrot.slane %v58, %v62
    %65 = vmatprep.subr.mxu0 0.0
    %66 = vmatpush1.msra.mxu0 %v57
    %67 = vmatprep.subr.mxu0 0.0
    %68 = vmatpush1.msra.mxu0 %v56
    %69 = vmatprep.subr.mxu0 0.0
    %70 = vmatpush1.msra.mxu0 %v55
    %71 = vmatprep.subr.mxu0 0.0
    %72 = vmatpush1.msra.mxu0 %v54
    %73 = vmatprep.subr.mxu0 0.0
    %74 = vmatpush1.msra.mxu0 %v53
    %75 = vmatprep.subr.mxu0 0.0
    %76 = vmatpush1.msra.mxu0 %v52
    %77 = vmatprep.subr.mxu0 0.0
    %78 = vmatpush1.msra.mxu0 %v51
    %79 = vmatprep.subr.mxu0 0.0
    %80 = vmatpush1.msra.mxu0 %v50
    %81 = vmatprep.subr.mxu0 0.0
    %82 = vmatpush1.msra.mxu0 %v49
    %83 = vmatprep.subr.mxu0 0.0
    %84 = vmatpush1.msra.mxu0 %v48
    %85 = vmatprep.subr.mxu0 0.0
    %86 = vmatpush1.msra.mxu0 %v47
    %87 = vmatprep.subr.mxu0 0.0
    %88 = vmatpush1.msra.mxu0 %v46
    %89 = vmatprep.subr.mxu0 0.0
    %90 = vmatpush1.msra.mxu0 %v45
    %91 = vmatprep.subr.mxu0 0.0
    %92 = vmatpush1.msra.mxu0 %v44
    %93 = vmatprep.subr.mxu0 0.0
    %94 = vmatpush1.msra.mxu0 %v43
    %95 = vmatprep.subr.mxu0 0.0
    %96 = vmatpush1.msra.mxu0 %v42
    %97 = vmatprep.subr.mxu0 0.0
    %98 = vmatpush2.msra.mxu0 0.0
    %99 = vmatprep.subr.mxu0 0.0
    %100 = vmatpush2.msra.mxu0 0.0
    %101 = vmatprep.subr.mxu0 0.0
    %102 = vmatpush2.msra.mxu0 0.0
    %103 = vmatprep.subr.mxu0 0.0
    %104 = vmatpush2.msra.mxu0 0.0
    %105 = vmatprep.subr.mxu0 0.0
    %106 = vmatpush2.msra.mxu0 0.0
    %107 = vmatprep.subr.mxu0 0.0
    %108 = vmatpush2.msra.mxu0 0.0
    %109 = vmatprep.subr.mxu0 0.0
    %110 = vmatpush2.msra.mxu0 0.0
    %111 = vmatprep.subr.mxu0 0.0
    %112 = vmatpush2.msra.mxu0 0.0
    %113 = vmatprep.subr.mxu0 0.0
    %114 = vmatpush2.msra.mxu0 0.0
    %115 = vmatprep.subr.mxu0 0.0
    %116 = vmatpush2.msra.mxu0 0.0
    %117 = vmatprep.subr.mxu0 0.0
    %118 = vmatpush2.msra.mxu0 0.0
    %119 = vmatprep.subr.mxu0 0.0
    %120 = vmatpush2.msra.mxu0 0.0
    %121 = vmatprep.subr.mxu0 0.0
    %122 = vmatpush2.msra.mxu0 0.0
    %123 = vmatprep.subr.mxu0 0.0
    %124 = vmatpush2.msra.mxu0 0.0
    %125 = vmatprep.subr.mxu0 0.0
    %126 = vmatpush2.msra.mxu0 0.0
    %127 = vmatprep.subr.mxu0 0.0
    %128 = vmatpush2.msra.mxu0 0.0
    %129 = vmatprep.mubr.f32.mxu0 0.0
    %130 = vmatmul.mubr.f32.gmra.mxu0 %v41
    %v131 = vpop.f32.mrf.mxu0
    %v132 = vadd.f32 %v63, %v131
    %v133 = vpop.f32.mrf.mxu0
    %134 = vdwg.mxu0
    %135 = vmax.xlane.f32.xlu0 %v132
    %v136 = vpop.xlane.xlu0 %135
    %v137 = vsub.f32 %v132, %v136
    %v138 = vmul.f32 %v137, 1.442695
    %v139 = vpow.pop %v138
    %140 = vadd.xlane.f32.xlu0 %v139
    %v141 = vpop.xlane.xlu0 %140
    %v142 = vrcp.pop %v141
    %v143 = vmul.f32 %v141, %v142
    %v144 = vsub.f32 2.0, %v143
    %v145 = vmul.f32 %v142, %v144
    %v146 = vmul.f32 %v139, %v145
    %147 = vst [vmem:[#allocation7] sm:$0xff] %v146
    // Predicated region
    $region22: #{tpu_custom_call.1} parent=1 // pred_check
      _
    $region23: #{tpu_custom_call.1} parent=1 // pred_check_branch
      %149 = sbr.rel (0) target = $region25
    $region24: #{tpu_custom_call.1} parent=1 // pred_region
      %s151 = ssub.s32 128, 128
      %152 = vsyncadd [#allocation4], %s151
      %s154 = sshll.u32 [#allocation7], 4
      %s155 = int_to_ptr.vmem [resolvable:$true] %s154
      %157 = dma.vmem_to_hbm [thread:$0]  %s155, 128, %s3, [#allocation4]
    $region25: #{tpu_custom_call.1} parent=1 // pred_fallthru
      _
    // Predicated region
    $region26: #{tpu_custom_call.1} parent=1 // pred_check
      _
    $region27: #{tpu_custom_call.1} parent=1 // pred_check_branch
      %159 = sbr.rel (0) target = $region29
    $region28: #{tpu_custom_call.1} parent=1 // pred_region
      %160 = dma.done [#allocation4], 128
    $region29: #{tpu_custom_call.1} parent=1 // pred_fallthru
      _
    %161 = vsyncpa [#allocation3], 1
    %162 = vsyncpa [#allocation6], 1
    %163 = vsyncpa [#allocation4], 1

</llo_original>
